<compile_context>
chip_gen: v5e
topology: v5e:2x2
jax: 0.10.0
libtpu: 0.0.40
codegen_flags: <defaults>
</compile_context>

<pallas_src>
import functools

import jax
import jax.numpy as jnp
from jax.experimental import pallas as pl
from jax.experimental.pallas import tpu as pltpu

_EPS = 1e-8                          # torch.nn.CosineSimilarity default eps
_VMEM_HEADROOM_BYTES = 8 * 1024 * 1024


def _cos_loss_kernel(x_ref, y_ref, out_ref, *, n_rows, seg, hidden):
    """One row tile: partial sum of (1 - cos_sim) over the tile's logical rows.

    x_ref, y_ref: (TN, W) VMEM tiles with W = seg * hidden (seg logical rows of
    width `hidden` packed per physical row).  out_ref: this tile's (1, 1) SMEM
    partial.
    """
    t = pl.program_id(0)
    tn, w = x_ref.shape

    x = x_ref[...].astype(jnp.float32)   # f32 math even for bf16 inputs
    y = y_ref[...].astype(jnp.float32)

    # Segmented per-row reduction as an MXU matmul against a block-diagonal
    # ones matrix (plain ones column when seg == 1).  Keeps the lane-axis
    # reduce off the XLU (previous bottleneck) and on the idle MXU.
    ridx = jax.lax.broadcasted_iota(jnp.int32, (w, seg), 0)
    cidx = jax.lax.broadcasted_iota(jnp.int32, (w, seg), 1)
    lo = cidx * hidden
    sel = jnp.where(jnp.logical_and(ridx >= lo, ridx < lo + hidden), 1.0, 0.0)
    sel = sel.astype(jnp.float32)

    dot = jnp.dot(x * y, sel, preferred_element_type=jnp.float32)   # (TN, seg)
    nx2 = jnp.dot(x * x, sel, preferred_element_type=jnp.float32)
    ny2 = jnp.dot(y * y, sel, preferred_element_type=jnp.float32)

    # ATen cosine_similarity: w12 * rsqrt(clamp_min(w1 * w2, eps^2)).
    inv = jax.lax.rsqrt(jnp.maximum(nx2 * ny2, _EPS * _EPS))
    loss = 1.0 - dot * inv

    # Mask logical rows past N (covers the partial last tile; garbage in the
    # unread tail of the block never reaches the sum).
    phys = t * tn + jax.lax.broadcasted_iota(jnp.int32, (tn, seg), 0)
    segi = jax.lax.broadcasted_iota(jnp.int32, (tn, seg), 1)
    loss = jnp.where(phys * seg + segi < n_rows, loss, 0.0)

    out_ref[0, 0] = jnp.sum(loss)


def _vmem_limit_bytes():
    """Chip-gated scoped-VMEM limit, with headroom under the physical cap."""
    try:
        cap = int(getattr(pltpu.get_tpu_info(), "vmem_capacity_bytes", 0) or 0)
    except Exception:
        cap = 0
    if cap and cap <= 64 * 1024 * 1024:                 # v7x-class: 64 MiB per TC
        return max(16 * 1024 * 1024, cap - 12 * 1024 * 1024)
    if cap:                                             # v5e / v6e: 128 MiB physical
        return 64 * 1024 * 1024
    return 32 * 1024 * 1024                             # unknown: conservative


def _choose_tile_rows(n_phys, width, itemsize, vmem_limit):
    """Physical rows per tile so the whole per-step working set fits VMEM.

    Per row: 2 inputs x 2 pipeline buffers in the input dtype, ~4 block-sized
    f32 intermediates (casts + products feeding the MXU reductions), plus ~8
    lane-padded (TN, seg) f32 epilogue values that Mosaic also keeps in scoped
    VMEM.  Conservative on purpose — an OOM is worth nothing.
    """
    lane_padded = pl.cdiv(width, 128) * 128
    bytes_per_row = lane_padded * (4 * itemsize + 4 * 4) + 8 * 128 * 4
    rows = (vmem_limit - _VMEM_HEADROOM_BYTES) // bytes_per_row
    rows = max(16, (rows // 16) * 16)     # sublane packing: 8 (f32) / 16 (bf16)
    return int(n_phys) if rows >= n_phys else int(rows)


@functools.partial(jax.jit, static_argnames=("reduction", "tile_rows"))
def cosine_similarity_loss(x, y, reduction: str = "mean", tile_rows=None):
    assert reduction in ("mean", "sum"), "reduction is incorrect"
    assert x.shape == y.shape and x.ndim == 3
    B, S, H = x.shape
    N = B * S

    # Small-H row packing: pack k = 128 // H logical rows per physical row when
    # it is a free contiguous reshape (no padding copy needed).
    seg = 1
    if H < 128 and 128 % H == 0 and N % (128 // H) == 0:
        seg = 128 // H
    n_phys = N // seg
    W = seg * H

    # No dtype upcast here: bf16 stays bf16 in HBM; the kernel upcasts to f32.
    x2 = x.reshape(n_phys, W)
    y2 = y.reshape(n_phys, W)

    itemsize = jnp.dtype(x.dtype).itemsize
    vmem_limit = _vmem_limit_bytes()
    if tile_rows is None:
        tn = _choose_tile_rows(n_phys, W, itemsize, vmem_limit)
    else:
        tn = max(16, ((int(tile_rows) + 15) // 16) * 16)   # sublane-friendly
        tn = min(tn, n_phys)

    tiles = pl.cdiv(n_phys, tn)

    kernel = functools.partial(_cos_loss_kernel, n_rows=N, seg=seg, hidden=H)

    partials = pl.pallas_call(
        kernel,
        out_shape=jax.ShapeDtypeStruct((tiles, 1), jnp.float32),
        grid=(tiles,),
        in_specs=[
            pl.BlockSpec((tn, W), lambda t: (t, 0)),
            pl.BlockSpec((tn, W), lambda t: (t, 0)),
        ],
        out_specs=pl.BlockSpec((1, 1), lambda t: (t, 0), memory_space=pltpu.SMEM),
        compiler_params=pltpu.CompilerParams(
            dimension_semantics=("parallel",),
            vmem_limit_bytes=vmem_limit,
        ),
    )(x2, y2)

    total = jnp.sum(partials)   # tree-sum of per-tile partials in the wrapper
    if reduction == "mean":
        total = total / jnp.float32(N)
    return total


def _reference(x, y, reduction="mean"):
    # Pure-JAX reference mirroring torch.nn.CosineSimilarity(dim=2):
    #   sim = dot / max(||x|| * ||y||, eps)
    xf = x.astype(jnp.float32)
    yf = y.astype(jnp.float32)
    dot = jnp.sum(xf * yf, axis=2)
    nx = jnp.linalg.norm(xf, axis=2)
    ny = jnp.linalg.norm(yf, axis=2)
    sim = dot / jnp.maximum(nx * ny, _EPS)
    loss = 1.0 - sim
    return loss.mean() if reduction == "mean" else loss.sum()


if __name__ == "__main__":
    key = jax.random.PRNGKey(0)
    k1, k2, k3, k4 = jax.random.split(key, 4)

    # Shape implied by the module (dim=2 => (B, S, H), cosine along hidden).
    B, S, H = 2, 8, 32
    x = jax.random.normal(k1, (B, S, H), dtype=jnp.float32)
    y = jax.random.normal(k2, (B, S, H), dtype=jnp.float32)

    out_mean = jax.block_until_ready(cosine_similarity_loss(x, y, "mean"))
    out_sum = jax.block_until_ready(cosine_similarity_loss(x, y, "sum"))
    ref_mean = _reference(x, y, "mean")
    ref_sum = _reference(x, y, "sum")
    # Tolerance allows for the MXU reduction path (f32 products through the MXU
    # may take bf16 passes at default precision) while still catching masking /
    # packing / reduction bugs by a wide margin.
    assert jnp.allclose(out_mean, ref_mean, rtol=1e-3, atol=1e-3), (out_mean, ref_mean)
    assert jnp.allclose(out_sum, ref_sum, rtol=1e-3, atol=1e-3), (out_sum, ref_sum)

    # Multi-tile path: ragged row count with H that does not divide 128
    # (unpacked path) plus a small forced tile exercises the per-tile partials
    # and the partial-last-tile row mask.
    B2, S2, H2 = 3, 37, 50
    x2 = jax.random.normal(k3, (B2, S2, H2), dtype=jnp.float32)
    y2 = jax.random.normal(k4, (B2, S2, H2), dtype=jnp.float32)
    out2 = jax.block_until_ready(cosine_similarity_loss(x2, y2, "mean", tile_rows=16))
    ref2 = _reference(x2, y2, "mean")
    assert jnp.allclose(out2, ref2, rtol=1e-3, atol=1e-3), (out2, ref2)

    # bf16 inputs stay bf16 in HBM; packed path (seg=4), kernel math in f32.
    xb = x.astype(jnp.bfloat16)
    yb = y.astype(jnp.bfloat16)
    outb = jax.block_until_ready(cosine_similarity_loss(xb, yb, "sum"))
    refb = _reference(xb, yb, "sum")
    assert jnp.allclose(outb, refb, rtol=2e-3, atol=2e-3), (outb, refb)

    print("KERNEL_OK")
</pallas_src>

<mosaic_0001>
module attributes {stable_mosaic.version = 11 : i64} {
  func.func @_cos_loss_kernel(%arg0: i32, %arg1: memref<4x128xf32, #tpu.memory_space<vmem>>, %arg2: memref<4x128xf32, #tpu.memory_space<vmem>>, %arg3: memref<1x1xf32, #tpu.memory_space<smem>>) attributes {dimension_semantics = [#tpu.dimension_semantics<parallel>], iteration_bounds = array<i64: 1>, scalar_prefetch = 0 : i64, scratch_operands = 0 : i64, tpu.core_type = #tpu.core_type<tc>, window_params = [{transform_indices = @transform_0, window_bounds = array<i64: 4, 128>}, {transform_indices = @transform_1, window_bounds = array<i64: 4, 128>}, {transform_indices = @transform_2, window_bounds = array<i64: 1, 1>}]} {
    %c0 = arith.constant 0 : index
    %c0_0 = arith.constant 0 : index
    %0 = vector.load %arg1[%c0, %c0_0] : memref<4x128xf32, #tpu.memory_space<vmem>>, vector<4x128xf32>
    %c0_1 = arith.constant 0 : index
    %c0_2 = arith.constant 0 : index
    %1 = vector.load %arg2[%c0_1, %c0_2] : memref<4x128xf32, #tpu.memory_space<vmem>>, vector<4x128xf32>
    %2 = tpu.iota {dimensions = array<i32: 0>} : vector<128x4xi32>
    %3 = tpu.iota {dimensions = array<i32: 1>} : vector<128x4xi32>
    %c32_i32 = arith.constant 32 : i32
    %4 = vector.broadcast %c32_i32 : i32 to vector<128x4xi32>
    %5 = arith.muli %3, %4 : vector<128x4xi32>
    %6 = arith.cmpi sge, %2, %5 : vector<128x4xi32>
    %c32_i32_3 = arith.constant 32 : i32
    %7 = vector.broadcast %c32_i32_3 : i32 to vector<128x4xi32>
    %8 = arith.addi %5, %7 : vector<128x4xi32>
    %9 = arith.cmpi slt, %2, %8 : vector<128x4xi32>
    %10 = arith.andi %6, %9 : vector<128x4xi1>
    %cst = arith.constant 1.000000e+00 : f32
    %cst_4 = arith.constant 0.000000e+00 : f32
    %11 = vector.broadcast %cst : f32 to vector<128x4xf32>
    %12 = vector.broadcast %cst_4 : f32 to vector<128x4xf32>
    %13 = arith.select %10, %11, %12 : vector<128x4xi1>, vector<128x4xf32>
    %14 = arith.mulf %0, %1 : vector<4x128xf32>
    %cst_5 = arith.constant dense<0.000000e+00> : vector<4x4xf32>
    %15 = tpu.matmul %14, %13, %cst_5 {dimension_numbers = #tpu.dot_dimension_numbers<[1], [0], [0], [1], [0, 0, 1, 1], [], []>} : vector<4x128xf32>, vector<128x4xf32>, vector<4x4xf32> -> vector<4x4xf32>
    %16 = arith.mulf %0, %0 : vector<4x128xf32>
    %cst_6 = arith.constant dense<0.000000e+00> : vector<4x4xf32>
    %17 = tpu.matmul %16, %13, %cst_6 {dimension_numbers = #tpu.dot_dimension_numbers<[1], [0], [0], [1], [0, 0, 1, 1], [], []>} : vector<4x128xf32>, vector<128x4xf32>, vector<4x4xf32> -> vector<4x4xf32>
    %18 = arith.mulf %1, %1 : vector<4x128xf32>
    %cst_7 = arith.constant dense<0.000000e+00> : vector<4x4xf32>
    %19 = tpu.matmul %18, %13, %cst_7 {dimension_numbers = #tpu.dot_dimension_numbers<[1], [0], [0], [1], [0, 0, 1, 1], [], []>} : vector<4x128xf32>, vector<128x4xf32>, vector<4x4xf32> -> vector<4x4xf32>
    %20 = arith.mulf %17, %19 : vector<4x4xf32>
    %cst_8 = arith.constant 1.000000e-16 : f32
    %21 = vector.broadcast %cst_8 : f32 to vector<4x4xf32>
    %22 = arith.maximumf %20, %21 : vector<4x4xf32>
    %23 = math.rsqrt %22 : vector<4x4xf32>
    %24 = arith.mulf %15, %23 : vector<4x4xf32>
    %cst_9 = arith.constant 1.000000e+00 : f32
    %25 = vector.broadcast %cst_9 : f32 to vector<4x4xf32>
    %26 = arith.subf %25, %24 : vector<4x4xf32>
    %c4_i32 = arith.constant 4 : i32
    %27 = arith.muli %arg0, %c4_i32 : i32
    %28 = tpu.iota {dimensions = array<i32: 0>} : vector<4x4xi32>
    %29 = vector.broadcast %27 : i32 to vector<4x4xi32>
    %30 = arith.addi %29, %28 : vector<4x4xi32>
    %31 = tpu.iota {dimensions = array<i32: 1>} : vector<4x4xi32>
    %c4_i32_10 = arith.constant 4 : i32
    %32 = vector.broadcast %c4_i32_10 : i32 to vector<4x4xi32>
    %33 = arith.muli %30, %32 : vector<4x4xi32>
    %34 = arith.addi %33, %31 : vector<4x4xi32>
    %c16_i32 = arith.constant 16 : i32
    %35 = vector.broadcast %c16_i32 : i32 to vector<4x4xi32>
    %36 = arith.cmpi slt, %34, %35 : vector<4x4xi32>
    %cst_11 = arith.constant 0.000000e+00 : f32
    %37 = vector.broadcast %cst_11 : f32 to vector<4x4xf32>
    %38 = arith.select %36, %26, %37 : vector<4x4xi1>, vector<4x4xf32>
    %39 = vector.shape_cast %38 : vector<4x4xf32> to vector<1x4x4xf32>
    %cst_12 = arith.constant dense<0.000000e+00> : vector<1xf32>
    %40 = vector.multi_reduction <add>, %39, %cst_12 [1, 2] : vector<1x4x4xf32> to vector<1xf32>
    %41 = vector.shape_cast %40 : vector<1xf32> to vector<1x1x1xf32>
    %42 = vector.extract %41[0, 0, 0] : f32 from vector<1x1x1xf32>
    %c0_13 = arith.constant 0 : index
    %c0_14 = arith.constant 0 : index
    %43 = memref.load %arg3[%c0_13, %c0_14] : memref<1x1xf32, #tpu.memory_space<smem>>
    memref.store %42, %arg3[%c0_13, %c0_14] : memref<1x1xf32, #tpu.memory_space<smem>>
    return
  }
  func.func @transform_0(%arg0: i32) -> (i32, i32) {
    %c0_i32 = arith.constant 0 : i32
    %c0_i32_0 = arith.constant 0 : i32
    return %arg0, %c0_i32 : i32, i32
  }
  func.func @transform_1(%arg0: i32) -> (i32, i32) {
    %c0_i32 = arith.constant 0 : i32
    %c0_i32_0 = arith.constant 0 : i32
    return %arg0, %c0_i32 : i32, i32
  }
  func.func @transform_2(%arg0: i32) -> (i32, i32) {
    %c0_i32 = arith.constant 0 : i32
    %c0_i32_0 = arith.constant 0 : i32
    return %arg0, %c0_i32 : i32, i32
  }
}

</mosaic_0001>

<llo_original>
// kernel: cosine_similarity_loss.1
$region0: #{cosine_similarity_loss.1}
  #allocation0 [shape = 'u32[]', space=smem, size = 0x4, offset = 0x4, fixed_abs, tag = 'smem constant byte address 0x4 - core index']
  #allocation1 [shape = 'u32[72,128]{1,0:T(1,128)}', space=vmem, size = 0x9000, scoped, tag = 'internal scratch']
  %s0 = inlined_call_operand.vmem [shape: f32[4,128], index: 0, kind: input, shape index: {}]
  %s1 = inlined_call_operand.vmem [shape: f32[4,128], index: 1, kind: input, shape index: {}]
  %s2 = inlined_call_operand.hbm [shape: f32[1,1], index: 2, kind: output, shape index: {}]
  %s3 = sld [smem:[#allocation0]]
  $region18: #{cosine_similarity_loss.1} parent=0
    _
  %s5 = ssub.s32 1, %s3
  %s6 = scalar_select 0, %s5, %s3
  $region1: #{cosine_similarity_loss.1} parent=0
    #allocation2 [shape = 'u8[512]{0}', space=smem, size = 0x200, scoped, tag = 'output window, operand 0, single buffered']
    #allocation3 [shape = 's32[1]{0}', space=sflag, size = 0x4, scoped, tag = 'scoped memory for cosine_similarity_loss.1']
    %7 = vsyncpa [#allocation3], 0
    // Predicated region
    $region2: #{cosine_similarity_loss.1} parent=1 // pred_check
      _
    $region3: #{cosine_similarity_loss.1} parent=1 // pred_check_branch
      %9 = sbr.rel (0) target = $region5
    $region4: #{cosine_similarity_loss.1} parent=1 // pred_region
      _
    $region5: #{cosine_similarity_loss.1} parent=1 // pred_fallthru
      _
    // Predicated region
    $region6: #{cosine_similarity_loss.1} parent=1 // pred_check
      _
    $region7: #{cosine_similarity_loss.1} parent=1 // pred_check_branch
      %11 = sbr.rel (0) target = $region9
    $region8: #{cosine_similarity_loss.1} parent=1 // pred_region
      _
    $region9: #{cosine_similarity_loss.1} parent=1 // pred_fallthru
      _
    %v12 = vld [vmem:[%s0] sm:$0xf]
    %v13 = vld [vmem:[%s1] sm:$0xf]
    %v14 = vlaneseq
    %v15 = vshrl.u32 %v14, 7
    %v16 = vadd.s32 %v15, 8
    %v17 = vadd.s32 %v15, 16
    %v18 = vadd.s32 %v15, 24
    %v19 = vadd.s32 %v15, 32
    %v20 = vadd.s32 %v15, 40
    %v21 = vadd.s32 %v15, 48
    %v22 = vadd.s32 %v15, 56
    %v23 = vadd.s32 %v15, 64
    %v24 = vadd.s32 %v15, 72
    %v25 = vadd.s32 %v15, 80
    %v26 = vadd.s32 %v15, 88
    %v27 = vadd.s32 %v15, 96
    %v28 = vadd.s32 %v15, 104
    %v29 = vadd.s32 %v15, 112
    %v30 = vadd.s32 %v15, 120
    %v31 = vlaneseq
    %v32 = vand.u32 %v31, 127
    %v33 = vmul.u32 %v32, 32
    %vm34 = vcmp.ge.s32.totalorder %v15, %v33
    %vm35 = vcmp.ge.s32.totalorder %v16, %v33
    %vm36 = vcmp.ge.s32.totalorder %v17, %v33
    %vm37 = vcmp.ge.s32.totalorder %v18, %v33
    %vm38 = vcmp.ge.s32.totalorder %v19, %v33
    %vm39 = vcmp.ge.s32.totalorder %v20, %v33
    %vm40 = vcmp.ge.s32.totalorder %v21, %v33
    %vm41 = vcmp.ge.s32.totalorder %v22, %v33
    %vm42 = vcmp.ge.s32.totalorder %v23, %v33
    %vm43 = vcmp.ge.s32.totalorder %v24, %v33
    %vm44 = vcmp.ge.s32.totalorder %v25, %v33
    %vm45 = vcmp.ge.s32.totalorder %v26, %v33
    %vm46 = vcmp.ge.s32.totalorder %v27, %v33
    %vm47 = vcmp.ge.s32.totalorder %v28, %v33
    %vm48 = vcmp.ge.s32.totalorder %v29, %v33
    %vm49 = vcmp.ge.s32.totalorder %v30, %v33
    %v50 = vadd.s32 %v33, 32
    %vm51 = vcmp.lt.s32.totalorder %v15, %v50
    %vm52 = vcmp.lt.s32.totalorder %v16, %v50
    %vm53 = vcmp.lt.s32.totalorder %v17, %v50
    %vm54 = vcmp.lt.s32.totalorder %v18, %v50
    %vm55 = vcmp.lt.s32.totalorder %v19, %v50
    %vm56 = vcmp.lt.s32.totalorder %v20, %v50
    %vm57 = vcmp.lt.s32.totalorder %v21, %v50
    %vm58 = vcmp.lt.s32.totalorder %v22, %v50
    %vm59 = vcmp.lt.s32.totalorder %v23, %v50
    %vm60 = vcmp.lt.s32.totalorder %v24, %v50
    %vm61 = vcmp.lt.s32.totalorder %v25, %v50
    %vm62 = vcmp.lt.s32.totalorder %v26, %v50
    %vm63 = vcmp.lt.s32.totalorder %v27, %v50
    %vm64 = vcmp.lt.s32.totalorder %v28, %v50
    %vm65 = vcmp.lt.s32.totalorder %v29, %v50
    %vm66 = vcmp.lt.s32.totalorder %v30, %v50
    %vm67 = vmand %vm34, %vm51
    %vm68 = vmand %vm35, %vm52
    %vm69 = vmand %vm36, %vm53
    %vm70 = vmand %vm37, %vm54
    %vm71 = vmand %vm38, %vm55
    %vm72 = vmand %vm39, %vm56
    %vm73 = vmand %vm40, %vm57
    %vm74 = vmand %vm41, %vm58
    %vm75 = vmand %vm42, %vm59
    %vm76 = vmand %vm43, %vm60
    %vm77 = vmand %vm44, %vm61
    %vm78 = vmand %vm45, %vm62
    %vm79 = vmand %vm46, %vm63
    %vm80 = vmand %vm47, %vm64
    %vm81 = vmand %vm48, %vm65
    %vm82 = vmand %vm49, %vm66
    %v83 = vsel %vm67, 1.0, 0.0
    %v84 = vsel %vm68, 1.0, 0.0
    %v85 = vsel %vm69, 1.0, 0.0
    %v86 = vsel %vm70, 1.0, 0.0
    %v87 = vsel %vm71, 1.0, 0.0
    %v88 = vsel %vm72, 1.0, 0.0
    %v89 = vsel %vm73, 1.0, 0.0
    %v90 = vsel %vm74, 1.0, 0.0
    %v91 = vsel %vm75, 1.0, 0.0
    %v92 = vsel %vm76, 1.0, 0.0
    %v93 = vsel %vm77, 1.0, 0.0
    %v94 = vsel %vm78, 1.0, 0.0
    %v95 = vsel %vm79, 1.0, 0.0
    %v96 = vsel %vm80, 1.0, 0.0
    %v97 = vsel %vm81, 1.0, 0.0
    %v98 = vsel %vm82, 1.0, 0.0
    %v99 = vmul.f32 %v12, %v13
    %100 = vmatpush.msra.mxu0 %v98
    %101 = vmatpush.msra.mxu0 %v97
    %102 = vmatpush.msra.mxu0 %v96
    %103 = vmatpush.msra.mxu0 %v95
    %104 = vmatpush.msra.mxu0 %v94
    %105 = vmatpush.msra.mxu0 %v93
    %106 = vmatpush.msra.mxu0 %v92
    %107 = vmatpush.msra.mxu0 %v91
    %108 = vmatpush.msra.mxu0 %v90
    %109 = vmatpush.msra.mxu0 %v89
    %110 = vmatpush.msra.mxu0 %v88
    %111 = vmatpush.msra.mxu0 %v87
    %112 = vmatpush.msra.mxu0 %v86
    %113 = vmatpush.msra.mxu0 %v85
    %114 = vmatpush.msra.mxu0 %v84
    %115 = vmatpush.msra.mxu0 %v83
    %116 = vmatmul.f32.gmra.mxu0 %v99
    %v117 = vpop.f32.mrf.mxu0
    %v118 = vadd.f32 0.0, %v117
    %119 = vdwg.mxu0
    %v120 = vmul.f32 %v12, %v12
    %121 = vmatpush.msra.mxu0 %v98
    %122 = vmatpush.msra.mxu0 %v97
    %123 = vmatpush.msra.mxu0 %v96
    %124 = vmatpush.msra.mxu0 %v95
    %125 = vmatpush.msra.mxu0 %v94
    %126 = vmatpush.msra.mxu0 %v93
    %127 = vmatpush.msra.mxu0 %v92
    %128 = vmatpush.msra.mxu0 %v91
    %129 = vmatpush.msra.mxu0 %v90
    %130 = vmatpush.msra.mxu0 %v89
    %131 = vmatpush.msra.mxu0 %v88
    %132 = vmatpush.msra.mxu0 %v87
    %133 = vmatpush.msra.mxu0 %v86
    %134 = vmatpush.msra.mxu0 %v85
    %135 = vmatpush.msra.mxu0 %v84
    %136 = vmatpush.msra.mxu0 %v83
    %137 = vmatmul.f32.gmra.mxu0 %v120
    %v138 = vpop.f32.mrf.mxu0
    %v139 = vadd.f32 0.0, %v138
    %140 = vdwg.mxu0
    %v141 = vmul.f32 %v13, %v13
    %142 = vmatpush.msra.mxu0 %v98
    %143 = vmatpush.msra.mxu0 %v97
    %144 = vmatpush.msra.mxu0 %v96
    %145 = vmatpush.msra.mxu0 %v95
    %146 = vmatpush.msra.mxu0 %v94
    %147 = vmatpush.msra.mxu0 %v93
    %148 = vmatpush.msra.mxu0 %v92
    %149 = vmatpush.msra.mxu0 %v91
    %150 = vmatpush.msra.mxu0 %v90
    %151 = vmatpush.msra.mxu0 %v89
    %152 = vmatpush.msra.mxu0 %v88
    %153 = vmatpush.msra.mxu0 %v87
    %154 = vmatpush.msra.mxu0 %v86
    %155 = vmatpush.msra.mxu0 %v85
    %156 = vmatpush.msra.mxu0 %v84
    %157 = vmatpush.msra.mxu0 %v83
    %158 = vmatmul.f32.gmra.mxu0 %v141
    %v159 = vpop.f32.mrf.mxu0
    %v160 = vadd.f32 0.0, %v159
    %161 = vdwg.mxu0
    %v162 = vmul.f32 %v139, %v160
    %v163 = vmax.f32 %v162, 1e-16
    %v164 = vrsqrt.pop %v163
    %v165 = vmul.f32 %v164, %v163
    %v166 = vmul.f32 %v165, %v164
    %v167 = vmul.f32 0.5, %v166
    %v168 = vsub.f32 1.5, %v167
    %v169 = vmul.f32 %v164, %v168
    %vm170 = vweird.f32 %v163
    %vm171 = vweird.f32 %v164
    %vm172 = vmor %vm170, %vm171
    %v173 = vsel %vm172, %v164, %v169
    %v174 = vmul.f32 %v118, %v173
    %v175 = vsub.f32 1.0, %v174
    %s176 = smul.u32 0, 4
    %v177 = vstv %s176
    %v178 = vadd.s32 %v177, %v15
    %v179 = vmul.u32 %v178, 4
    %v180 = vadd.s32 %v179, %v32
    %vm181 = vcmp.lt.s32.totalorder %v180, 16
    %v182 = vsel %vm181, %v175, 0.0
    %vm183 = vcmask 27648
    %v184 = vsel %vm183, %v182, 0.0
    %185 = vadd.xlane.f32.xlu0 %v184
    %v186 = vpop.xlane.xlu0 %185
    %v187 = vrot.slane %v186, 4
    %v188 = vadd.f32 %v186, %v187
    %v189 = vrot.slane %v188, 2
    %v190 = vadd.f32 %v188, %v189
    %v191 = vrot.slane %v190, 1
    %v192 = vadd.f32 %v190, %v191
    %s193 = vtos %v192
    %s194 = scalar_lea.smem [#allocation2], 0
    %195 = sst [smem:[%s194]] %s193
    // Predicated region
    $region10: #{cosine_similarity_loss.1} parent=1 // pred_check
      _
    $region11: #{cosine_similarity_loss.1} parent=1 // pred_check_branch
      %197 = sbr.rel (0) target = $region13
    $region12: #{cosine_similarity_loss.1} parent=1 // pred_region
      %199 = vsyncadd [#allocation3], 0
      %s201 = sshll.u32 %s2, 4
      %s202 = int_to_ptr.hbm [resolvable:$true] %s201
      %204 = dma.smem_to_hbm [#allocation2], 16, %s202, [#allocation3]
    $region13: #{cosine_similarity_loss.1} parent=1 // pred_fallthru
      _
    // Predicated region
    $region14: #{cosine_similarity_loss.1} parent=1 // pred_check
      _
    $region15: #{cosine_similarity_loss.1} parent=1 // pred_check_branch
      %206 = sbr.rel (0) target = $region17
    $region16: #{cosine_similarity_loss.1} parent=1 // pred_region
      %208 = dma.done [#allocation3], 16
    $region17: #{cosine_similarity_loss.1} parent=1 // pred_fallthru
      _
    %209 = sfence
    %210 = vsyncpa [#allocation3], 1

</llo_original>
